<compile_context>
chip_gen: v5e
topology: v5e:2x2
jax: 0.10.0
libtpu: 0.0.40
codegen_flags: <defaults>
</compile_context>

<pallas_src>
import math
import functools
import numpy as np

import jax
import jax.numpy as jnp
from jax.experimental import pallas as pl
from jax.experimental.pallas import tpu as pltpu


# ----------------------------------------------------------------------------
# Configuration consistent with the module hyper-parameters
# ----------------------------------------------------------------------------
IRREPS_INPUT_DIM = 4          # irreps_input  = "4x0e"
IRREPS_EMB_DIMS = [32, 32]    # irreps_emb    = ["32x0e", "32x0e"]
IRREPS_OUTPUT_DIM = 16        # irreps_output = "16x0e"
EDGE_SH_DIM = 4               # irreps_edge_attr = "1x0e + 1x1e" -> 4 components
NUM_HEADS = [4, 4]
FC_NEURONS = [[8, 16], [8, 16]]   # fc_neurons[n][0] == number of radial basis fns
N_LAYERS = [2, 2]
POOL_RATIO = [0.5, 0.5]
RADIUS_CFG = [1.2, None]
IRREPS_MLP_MID = 3
N_SCALES = 2
DETERMINISTIC = True          # -> FPS random_start = False

# Tile sizes for the attention kernel.  For production point clouds use
# ~(256, 512) on v5e/v6e; on v7x keep TN <= 512 so the double-buffered working
# set stays well under the 64 MiB physical VMEM.  Small values here so the toy
# demo below actually exercises the multi-tile / online-softmax path.
TILE_M = 64     # dst-row tile  ("parallel" grid axis -> megacore sharded)
TILE_N = 128    # src/KV tile   ("arbitrary" streaming axis, online softmax)


def compute_radii():
    """Reproduces the (quirky) radius-derivation loop of the PyTorch __init__."""
    radii = [RADIUS_CFG[0]]
    for n, r in enumerate(RADIUS_CFG[1:]):
        if r is None:
            radii.append(radii[-1] / math.sqrt(POOL_RATIO[n - 1]))
        else:
            radii.append(r)
    return radii


def _round_up(x, m):
    return (x + m - 1) // m * m


def _pad_rows(a, rows, value=0):
    pad = rows - a.shape[0]
    if pad <= 0:
        return a
    return jnp.concatenate(
        [a, jnp.full((pad,) + a.shape[1:], value, a.dtype)], axis=0)


# ----------------------------------------------------------------------------
# Pallas kernel 1: dense linear layer  y = x @ W + b   (LinearRS)
# ----------------------------------------------------------------------------
def _linear_kernel(x_ref, w_ref, b_ref, o_ref):
    o_ref[...] = (jnp.dot(x_ref[...].astype(jnp.bfloat16), w_ref[...],
                          preferred_element_type=jnp.float32)
                  + b_ref[...]).astype(o_ref.dtype)


def linear(x, w, b, *, block_rows=256):
    """y = x @ W + b.  Single block for small N, 256-row tiles otherwise."""
    n, cin = x.shape
    cout = w.shape[1]
    b2 = b.reshape(1, cout).astype(jnp.float32)
    if n <= block_rows:
        return pl.pallas_call(
            _linear_kernel,
            out_shape=jax.ShapeDtypeStruct((n, cout), jnp.float32),
        )(x, w, b2)
    n_pad = _round_up(n, block_rows)
    xp = _pad_rows(x, n_pad)
    out = pl.pallas_call(
        _linear_kernel,
        out_shape=jax.ShapeDtypeStruct((n_pad, cout), jnp.float32),
        grid=(n_pad // block_rows,),
        in_specs=[pl.BlockSpec((block_rows, cin), lambda i: (i, 0)),
                  pl.BlockSpec((cin, cout), lambda i: (0, 0)),
                  pl.BlockSpec((1, cout), lambda i: (0, 0))],
        out_specs=pl.BlockSpec((block_rows, cout), lambda i: (i, 0)),
        compiler_params=pltpu.CompilerParams(dimension_semantics=("parallel",)),
    )(xp, w, b2)
    return out[:n]


# ----------------------------------------------------------------------------
# Pallas kernel 2: one EquiformerBlock-style GNN layer
#   tiled over dst rows (parallel) x src/KV tiles (arbitrary, online softmax)
# ----------------------------------------------------------------------------
def _equiformer_kernel(dst_x_ref, dst_m_ref, src_x_ref, src_m_ref,
                       dst_f_ref, src_f_ref,
                       wq_ref, wkv_ref, wr_ref, wsh_ref,
                       wo_ref, bo_ref, w1_ref, b1_ref, w2_ref, b2_ref,
                       *rest,
                       num_heads, num_basis, radius, cutoff,
                       exclude_self, project_out):
    if project_out:
        wp_ref, bp_ref, o_ref, p_out_ref, m_sc, l_sc, acc_sc = rest
    else:
        o_ref, m_sc, l_sc, acc_sc = rest
        wp_ref = bp_ref = p_out_ref = None

    j = pl.program_id(1)
    nj = pl.num_programs(1)
    H = num_heads

    dst_f = dst_f_ref[...]                      # (TM, C)  f32
    src_f = src_f_ref[...]                      # (TN, Cs) f32
    _, C = dst_f.shape
    dh = C // H

    # ---- init online-softmax accumulators at the first KV tile ---------------
    @pl.when(j == 0)
    def _init():
        m_sc[...] = jnp.full_like(m_sc, -1e30)
        l_sc[...] = jnp.zeros_like(l_sc)
        acc_sc[...] = jnp.zeros_like(acc_sc)

    # ---- edge geometry for this (dst tile, src tile) pair ---------------------
    dst_x = dst_x_ref[...]                      # (TM, 3)
    src_x = src_x_ref[...]                      # (3, TN)  src coords (row layout)
    dst_meta = dst_m_ref[...]                   # (TM, 2) int32  [batch, index]
    src_meta = src_m_ref[...]                   # (2, TN) int32
    dst_b = dst_meta[:, 0:1]
    src_b = src_meta[0:1, :]

    dx = src_x[0:1, :] - dst_x[:, 0:1]          # (TM, TN)
    dy = src_x[1:2, :] - dst_x[:, 1:2]
    dz = src_x[2:3, :] - dst_x[:, 2:3]
    d2 = dx * dx + dy * dy + dz * dz
    inv_d = jax.lax.rsqrt(d2 + 1e-12)           # EUP rsqrt (no sqrt + divide)
    d = d2 * inv_d

    mask = jnp.logical_and(d <= radius, src_b == dst_b)
    if exclude_self:
        mask = jnp.logical_and(mask, src_meta[1:2, :] != dst_meta[:, 1:2])
    maskf = mask.astype(jnp.float32)

    # ---- Q / fused K|V projections (bf16 MXU operands, f32 accumulation) ------
    inv_sqrt_dh = 1.0 / math.sqrt(dh)
    q = jnp.dot(dst_f.astype(jnp.bfloat16), wq_ref[...],
                preferred_element_type=jnp.float32) * inv_sqrt_dh      # (TM, C)
    kv = jnp.dot(src_f.astype(jnp.bfloat16), wkv_ref[...],
                 preferred_element_type=jnp.float32)                   # (TN, 2C)
    qh = jnp.stack([q[:, h * dh:(h + 1) * dh] for h in range(H)], 0)   # (H,TM,dh)
    kh = jnp.stack([kv[:, h * dh:(h + 1) * dh] for h in range(H)], 0)  # (H,TN,dh)
    vh = jnp.stack([kv[:, C + h * dh:C + (h + 1) * dh] for h in range(H)], 0)

    s = jnp.einsum('hmd,hnd->hmn',
                   qh.astype(jnp.bfloat16), kh.astype(jnp.bfloat16),
                   preferred_element_type=jnp.float32)                 # (H,TM,TN)

    # ---- edge bias: SH (l=0,1) + Gaussian RBF with finite cutoff --------------
    # Each basis term is generated once and immediately folded into the per-head
    # running bias sums (no materialized rbf[]/sh[] lists).
    wr = wr_ref[...]                            # (num_basis, H) f32
    wsh = wsh_ref[...]                          # (4, H) f32
    env = 0.5 * (jnp.cos(jnp.pi * jnp.minimum(d * (1.0 / cutoff), 1.0)) + 1.0)
    inv_std = num_basis / cutoff
    sqrt3 = math.sqrt(3.0)
    bias_h = [jnp.ones_like(d) * wsh[0, h] for h in range(H)]          # l=0 term
    for c, diff_c in enumerate((dx, dy, dz)):                          # l=1 terms
        t = (sqrt3 * diff_c) * inv_d
        for h in range(H):
            bias_h[h] = bias_h[h] + t * wsh[c + 1, h]
    for b_i in range(num_basis):                                       # radial terms
        center = cutoff * b_i / max(num_basis - 1, 1)
        g = jnp.exp(-0.5 * ((d - center) * inv_std) ** 2) * env
        for h in range(H):
            bias_h[h] = bias_h[h] + g * wr[b_i, h]
    s = jnp.where(mask[None, :, :], s + jnp.stack(bias_h, 0), -1e30)

    # ---- online softmax update (streamed over KV tiles) -----------------------
    m_prev = m_sc[...]                                                 # (H,TM,1)
    m_new = jnp.maximum(m_prev, jnp.max(s, axis=-1, keepdims=True))
    alpha = jnp.exp(m_prev - m_new)
    p = jnp.exp(s - m_new) * maskf[None, :, :]   # zero out masked / isolated rows
    l_sc[...] = alpha * l_sc[...] + jnp.sum(p, axis=-1, keepdims=True)
    acc_sc[...] = alpha * acc_sc[...] + jnp.einsum(
        'hmn,hnd->hmd', p.astype(jnp.bfloat16), vh.astype(jnp.bfloat16),
        preferred_element_type=jnp.float32)
    m_sc[...] = m_new

    # ---- epilogue at the last KV tile: proj + residual + FF (+ fused out-proj)
    @pl.when(j == nj - 1)
    def _finish():
        inv_l = pl.reciprocal(l_sc[...] + 1e-9, approx=True)           # (H,TM,1)
        attn = jnp.concatenate([acc_sc[h] * inv_l[h] for h in range(H)], axis=-1)
        proj = jnp.dot(attn.astype(jnp.bfloat16), wo_ref[...],
                       preferred_element_type=jnp.float32) + bo_ref[...]
        h1 = dst_f + proj
        ff = jnp.dot(h1.astype(jnp.bfloat16), w1_ref[...],
                     preferred_element_type=jnp.float32) + b1_ref[...]
        ff = jax.nn.gelu(ff)
        ff = jnp.dot(ff.astype(jnp.bfloat16), w2_ref[...],
                     preferred_element_type=jnp.float32) + b2_ref[...]
        out = h1 + ff
        o_ref[...] = out.astype(o_ref.dtype)
        if project_out:
            p_out_ref[...] = (jnp.dot(out.astype(jnp.bfloat16), wp_ref[...],
                                      preferred_element_type=jnp.float32)
                              + bp_ref[...]).astype(p_out_ref.dtype)


def equiformer_block(src_f, dst_f, src_x, dst_x, src_b, dst_b, p, *,
                     num_heads, num_basis, radius, exclude_self,
                     proj_w=None, proj_b=None,
                     tile_m=TILE_M, tile_n=TILE_N):
    """One EquiformerBlock GNN layer as a tiled, online-softmax Pallas kernel.

    TODO(synk): the exact e3nn tensor-product attention of EquiformerBlock is
    approximated by scalar-channel multi-head attention with SH/RBF edge biases.
    """
    M, C = dst_f.shape
    N, Cs = src_f.shape
    H = num_heads
    dh = C // H
    Mp = _round_up(M, tile_m)
    Np = _round_up(N, tile_n)
    nkv = Np // tile_n
    project_out = proj_w is not None

    f32, i32 = jnp.float32, jnp.int32
    dst_fp = _pad_rows(dst_f.astype(f32), Mp)
    src_fp = _pad_rows(src_f.astype(f32), Np)
    dst_xp = _pad_rows(dst_x.astype(f32), Mp)
    src_xp = _pad_rows(src_x.astype(f32), Np)
    # padded dst rows get batch -1, padded src rows batch -2 -> never adjacent
    dst_meta = jnp.stack(
        [_pad_rows(dst_b.astype(i32), Mp, -1),
         _pad_rows(jnp.arange(M, dtype=i32), Mp, -1)], axis=1)          # (Mp, 2)
    src_b_p = _pad_rows(src_b.astype(i32), Np, -2)
    src_i_p = _pad_rows(jnp.arange(N, dtype=i32), Np, -3)
    # src geometry / metadata in row layout, pre-tiled along the KV axis so the
    # per-tile block shapes satisfy the (8, 128) / full-dim constraint.
    src_geo = jnp.transpose(src_xp).reshape(3, nkv, tile_n).transpose(1, 0, 2)
    src_meta = jnp.stack([src_b_p, src_i_p], 0).reshape(
        2, nkv, tile_n).transpose(1, 0, 2)

    c_mid = p["w1"].shape[1]
    c2 = 2 * C

    in_specs = [
        pl.BlockSpec((tile_m, 3), lambda i, j: (i, 0)),             # dst coords
        pl.BlockSpec((tile_m, 2), lambda i, j: (i, 0)),             # dst batch/idx
        pl.BlockSpec((None, 3, tile_n), lambda i, j: (j, 0, 0)),    # src coord rows
        pl.BlockSpec((None, 2, tile_n), lambda i, j: (j, 0, 0)),    # src batch/idx
        pl.BlockSpec((tile_m, C), lambda i, j: (i, 0)),             # dst features
        pl.BlockSpec((tile_n, Cs), lambda i, j: (j, 0)),            # src features
        pl.BlockSpec((C, C), lambda i, j: (0, 0)),                  # wq  (bf16)
        pl.BlockSpec((Cs, c2), lambda i, j: (0, 0)),                # wkv (bf16)
        pl.BlockSpec((num_basis, H), lambda i, j: (0, 0)),          # wr
        pl.BlockSpec((EDGE_SH_DIM, H), lambda i, j: (0, 0)),        # wsh
        pl.BlockSpec((C, C), lambda i, j: (0, 0)),                  # wo
        pl.BlockSpec((1, C), lambda i, j: (0, 0)),                  # bo
        pl.BlockSpec((C, c_mid), lambda i, j: (0, 0)),              # w1
        pl.BlockSpec((1, c_mid), lambda i, j: (0, 0)),              # b1
        pl.BlockSpec((c_mid, C), lambda i, j: (0, 0)),              # w2
        pl.BlockSpec((1, C), lambda i, j: (0, 0)),                  # b2
    ]
    inputs = [dst_xp, dst_meta, src_geo, src_meta, dst_fp, src_fp,
              p["wq"], p["wkv"], p["wr"], p["wsh"],
              p["wo"], p["bo"], p["w1"], p["b1"], p["w2"], p["b2"]]

    if project_out:
        c_out = proj_w.shape[1]
        in_specs += [pl.BlockSpec((C, c_out), lambda i, j: (0, 0)),
                     pl.BlockSpec((1, c_out), lambda i, j: (0, 0))]
        inputs += [proj_w, proj_b]
        out_shape = (jax.ShapeDtypeStruct((Mp, C), f32),
                     jax.ShapeDtypeStruct((Mp, c_out), f32))
        out_specs = (pl.BlockSpec((tile_m, C), lambda i, j: (i, 0)),
                     pl.BlockSpec((tile_m, c_out), lambda i, j: (i, 0)))
    else:
        out_shape = jax.ShapeDtypeStruct((Mp, C), f32)
        out_specs = pl.BlockSpec((tile_m, C), lambda i, j: (i, 0))

    kern = functools.partial(
        _equiformer_kernel, num_heads=H, num_basis=num_basis,
        radius=float(radius), cutoff=0.99 * float(radius),
        exclude_self=exclude_self, project_out=project_out)

    flops = int(4 * Mp * Np * C                      # QK^T + PV
                + 2 * Np * Cs * c2 * (Mp // tile_m)  # fused K|V projection
                + 4 * Mp * C * C                     # Q and output projection
                + 4 * Mp * C * c_mid                 # feed-forward
                + 2 * Mp * Np * H * (num_basis + 4)) # edge-bias FMAs
    transcendentals = int(Mp * Np * (num_basis + 2) + Mp * c_mid)
    bytes_accessed = int(4 * (2 * Mp * C + Np * Cs + 8 * (Mp + Np))
                         + 2 * (2 * C * C + Cs * c2 + 2 * C * c_mid))

    result = pl.pallas_call(
        kern,
        grid=(Mp // tile_m, nkv),
        in_specs=in_specs,
        out_specs=out_specs,
        out_shape=out_shape,
        scratch_shapes=[pltpu.VMEM((H, tile_m, 1), f32),    # m_i
                        pltpu.VMEM((H, tile_m, 1), f32),    # l_i
                        pltpu.VMEM((H, tile_m, dh), f32)],  # acc
        compiler_params=pltpu.CompilerParams(
            dimension_semantics=("parallel", "arbitrary"),
            vmem_limit_bytes=32 * 1024 * 1024),
        cost_estimate=pl.CostEstimate(flops=flops,
                                      transcendentals=transcendentals,
                                      bytes_accessed=bytes_accessed),
    )(*inputs)

    if project_out:
        out, pout = result
        return out[:M], pout[:M]
    return result[:M]


# ----------------------------------------------------------------------------
# Farthest point sampling: device-side lax.fori_loop per batch element
# ----------------------------------------------------------------------------
def fps_device(coords, batch_np, ratio):
    """Deterministic FPS (random_start=False).

    TODO(synk): FPS is an inherently sequential, data-dependent selection; it
    runs as a device-side lax.fori_loop per batch element, not a Pallas kernel
    (only the tiny batch-id vector is host metadata).
    """
    sel_chunks, batch_chunks = [], []
    for b in np.unique(batch_np):
        ids = np.nonzero(batch_np == b)[0].astype(np.int32)
        n = int(ids.shape[0])
        m = max(1, int(math.ceil(ratio * n)))
        pts = coords[jnp.asarray(ids)]                      # (n, 3) on device
        dist0 = jnp.sum((pts - pts[0]) ** 2, axis=1)
        sel0 = jnp.zeros((m,), jnp.int32)

        def body(i, carry, pts=pts):
            sel, dist = carry
            nxt = jnp.argmax(dist).astype(jnp.int32)
            sel = sel.at[i].set(nxt)
            dist = jnp.minimum(dist, jnp.sum((pts - pts[nxt]) ** 2, axis=1))
            return sel, dist

        sel, _ = jax.lax.fori_loop(1, m, body, (sel0, dist0))
        sel_chunks.append(jnp.asarray(ids)[sel])
        batch_chunks.append(np.full((m,), b, np.int32))
    return jnp.concatenate(sel_chunks), np.concatenate(batch_chunks)


# ----------------------------------------------------------------------------
# Parameter initialization (deterministic, synthetic)
# ----------------------------------------------------------------------------
def _dense_init(key, shape, fan_in):
    return jax.random.normal(key, shape, jnp.float32) / math.sqrt(max(fan_in, 1))


def make_gnn_params(key, c_src, c_dst, num_heads, num_basis, mlp_mid):
    c_mid = mlp_mid * c_dst
    ks = jax.random.split(key, 8)
    bf16 = jnp.bfloat16
    return {
        "wq": _dense_init(ks[0], (c_dst, c_dst), c_dst).astype(bf16),
        "wkv": _dense_init(ks[1], (c_src, 2 * c_dst), c_src).astype(bf16),
        "wr": _dense_init(ks[2], (num_basis, num_heads), num_basis),
        "wsh": _dense_init(ks[3], (EDGE_SH_DIM, num_heads), EDGE_SH_DIM),
        "wo": _dense_init(ks[4], (c_dst, c_dst), c_dst).astype(bf16),
        "bo": jnp.zeros((1, c_dst), jnp.float32),
        "w1": _dense_init(ks[5], (c_dst, c_mid), c_dst).astype(bf16),
        "b1": jnp.zeros((1, c_mid), jnp.float32),
        "w2": _dense_init(ks[6], (c_mid, c_dst), c_mid).astype(bf16),
        "b2": jnp.zeros((1, c_dst), jnp.float32),
    }


def init_params(key):
    keys = jax.random.split(key, 4 + 4 * N_SCALES)
    params = {
        "input_emb_w": _dense_init(keys[0], (IRREPS_INPUT_DIM, IRREPS_EMB_DIMS[0]),
                                   IRREPS_INPUT_DIM).astype(jnp.bfloat16),
        "input_emb_b": jnp.zeros((1, IRREPS_EMB_DIMS[0]), jnp.float32),
        "blocks": [],
        "project_out": [],
    }
    ki = 1
    for n in range(N_SCALES):
        c_src = IRREPS_EMB_DIMS[max(n - 1, 0)]
        c_dst = IRREPS_EMB_DIMS[n]
        pool_layer = make_gnn_params(keys[ki], c_src, c_dst, NUM_HEADS[n],
                                     FC_NEURONS[n][0], IRREPS_MLP_MID)
        ki += 1
        layers = []
        for _ in range(N_LAYERS[n] - 1):
            layers.append(make_gnn_params(keys[ki], c_dst, c_dst, NUM_HEADS[n],
                                          FC_NEURONS[n][0], IRREPS_MLP_MID))
            ki += 1
        params["blocks"].append({"pool_layer": pool_layer, "layers": layers})
    for n in range(N_SCALES):
        params["project_out"].append(
            (_dense_init(keys[ki], (IRREPS_EMB_DIMS[n], IRREPS_OUTPUT_DIM),
                         IRREPS_EMB_DIMS[n]).astype(jnp.bfloat16),
             jnp.zeros((1, IRREPS_OUTPUT_DIM), jnp.float32)))
        ki += 1
    return params


# ----------------------------------------------------------------------------
# Forward pass (mirrors ForwardOnlyFeatureExtractor.forward)
# ----------------------------------------------------------------------------
def forward(params, node_coord, node_feature, batch):
    radii = compute_radii()
    batch_np = np.asarray(jax.device_get(batch)).astype(np.int32)  # tiny metadata
    node_coord = node_coord.astype(jnp.float32)
    batch = jnp.asarray(batch_np, jnp.int32)

    # input embedding (LinearRS)
    node_feature = linear(node_feature, params["input_emb_w"],
                          params["input_emb_b"])

    outputs = []
    for n in range(N_SCALES):
        blk = params["blocks"][n]
        proj_w, proj_b = params["project_out"][n]

        # ----- FPS pool (device-side fori_loop) -----
        pool_idx, dst_batch_np = fps_device(node_coord, batch_np, POOL_RATIO[n])
        dst_coord = node_coord[pool_idx]
        dst_batch = jnp.asarray(dst_batch_np, jnp.int32)
        dst_feature = node_feature[pool_idx]   # pool_proj: matching irreps -> identity

        # ----- pool-layer GNN: edges from all current nodes to pooled nodes -----
        fuse_here = len(blk["layers"]) == 0
        res = equiformer_block(node_feature, dst_feature, node_coord, dst_coord,
                               batch, dst_batch, blk["pool_layer"],
                               num_heads=NUM_HEADS[n], num_basis=FC_NEURONS[n][0],
                               radius=radii[n], exclude_self=False,
                               proj_w=proj_w if fuse_here else None,
                               proj_b=proj_b if fuse_here else None)
        if fuse_here:
            dst_feature, scale_out = res
        else:
            dst_feature = res
        node_feature, node_coord, batch, batch_np = (dst_feature, dst_coord,
                                                     dst_batch, dst_batch_np)

        # ----- radius-graph layer stack among pooled nodes -----
        for li, layer_p in enumerate(blk["layers"]):
            fuse_here = li == len(blk["layers"]) - 1
            res = equiformer_block(node_feature, node_feature, node_coord,
                                   node_coord, batch, batch, layer_p,
                                   num_heads=NUM_HEADS[n],
                                   num_basis=FC_NEURONS[n][0],
                                   radius=radii[n], exclude_self=True,
                                   proj_w=proj_w if fuse_here else None,
                                   proj_b=proj_b if fuse_here else None)
            if fuse_here:
                node_feature, scale_out = res
            else:
                node_feature = res

        outputs.append({"x": node_coord, "f": scale_out, "b": batch})
    return outputs


# ----------------------------------------------------------------------------
if __name__ == "__main__":
    key = jax.random.PRNGKey(0)
    k_param, k_coord, k_feat = jax.random.split(key, 3)

    # 2 point clouds x 128 points each -> exercises the multi-tile online
    # softmax path (grid (2, 2) on the first pool layer).
    n_per_cloud = 128
    n_total = 2 * n_per_cloud
    coords = jax.random.uniform(k_coord, (n_total, 3), jnp.float32)
    feats = jax.random.normal(k_feat, (n_total, IRREPS_INPUT_DIM), jnp.float32)
    batch = jnp.concatenate([jnp.zeros((n_per_cloud,), jnp.int32),
                             jnp.ones((n_per_cloud,), jnp.int32)])

    params = init_params(k_param)
    outputs = forward(params, coords, feats, batch)

    for pcd in outputs:
        jax.block_until_ready(pcd["f"])
        jax.block_until_ready(pcd["x"])
        assert pcd["f"].shape[1] == IRREPS_OUTPUT_DIM
        assert bool(jnp.all(jnp.isfinite(pcd["f"])))

    print("KERNEL_OK")
</pallas_src>

<mosaic_0001>
module attributes {stable_mosaic.version = 11 : i64} {
  func.func @_linear_kernel(%arg0: memref<256x4xf32, #tpu.memory_space<vmem>>, %arg1: memref<4x32xbf16, #tpu.memory_space<vmem>>, %arg2: memref<1x32xf32, #tpu.memory_space<vmem>>, %arg3: memref<256x32xf32, #tpu.memory_space<vmem>>) attributes {dimension_semantics = [], scalar_prefetch = 0 : i64, scratch_operands = 0 : i64, tpu.core_type = #tpu.core_type<tc>} {
    %c0 = arith.constant 0 : index
    %c0_0 = arith.constant 0 : index
    %0 = vector.load %arg0[%c0, %c0_0] : memref<256x4xf32, #tpu.memory_space<vmem>>, vector<256x4xf32>
    %1 = arith.truncf %0 : vector<256x4xf32> to vector<256x4xbf16>
    %c0_1 = arith.constant 0 : index
    %c0_2 = arith.constant 0 : index
    %2 = vector.load %arg1[%c0_1, %c0_2] : memref<4x32xbf16, #tpu.memory_space<vmem>>, vector<4x32xbf16>
    %cst = arith.constant dense<0.000000e+00> : vector<256x32xf32>
    %3 = tpu.matmul %1, %2, %cst {dimension_numbers = #tpu.dot_dimension_numbers<[1], [0], [0], [1], [0, 0, 1, 1], [], []>} : vector<256x4xbf16>, vector<4x32xbf16>, vector<256x32xf32> -> vector<256x32xf32>
    %c0_3 = arith.constant 0 : index
    %c0_4 = arith.constant 0 : index
    %4 = vector.load %arg2[%c0_3, %c0_4] : memref<1x32xf32, #tpu.memory_space<vmem>>, vector<1x32xf32>
    %5 = vector.broadcast %4 : vector<1x32xf32> to vector<256x32xf32>
    %6 = arith.addf %3, %5 : vector<256x32xf32>
    %c0_5 = arith.constant 0 : index
    %c0_6 = arith.constant 0 : index
    %7 = vector.load %arg3[%c0_5, %c0_6] : memref<256x32xf32, #tpu.memory_space<vmem>>, vector<256x32xf32>
    tpu.vector_store %arg3[%c0_5, %c0_6], %6 {strides = array<i32>} : memref<256x32xf32, #tpu.memory_space<vmem>>, vector<256x32xf32>,
    return
  }
}

</mosaic_0001>

<llo_original>
// kernel: tpu_custom_call.1
$region0: #{tpu_custom_call.1}
  #allocation0 [shape = 'u32[]', space=smem, size = 0x4, offset = 0x4, fixed_abs, tag = 'smem constant byte address 0x4 - core index']
  #allocation1 [shape = 'u32[72,128]{1,0:T(1,128)}', space=vmem, size = 0x9000, scoped, tag = 'internal scratch']
  %s0 = inlined_call_operand.vmem [shape: f32[256,4], index: 0, kind: input, shape index: {}]
  %s1 = inlined_call_operand.vmem [shape: bf16[4,32], index: 1, kind: input, shape index: {}]
  %s2 = inlined_call_operand.vmem [shape: f32[1,32], index: 2, kind: input, shape index: {}]
  %s3 = inlined_call_operand.vmem [shape: f32[256,32], index: 3, kind: output, shape index: {}]
  %s4 = sld [smem:[#allocation0]]
  $region22: #{tpu_custom_call.1} parent=0
    _
  %s6 = ssub.s32 1, %s4
  %s7 = scalar_select 0, %s6, %s4
  // Predicated region
  $region2: #{tpu_custom_call.1} parent=0 // pred_check
    _
  $region3: #{tpu_custom_call.1} parent=0 // pred_check_branch
    %9 = sbr.rel (0) target = $region5
  $region4: #{tpu_custom_call.1} parent=0 // pred_region
    _
  $region5: #{tpu_custom_call.1} parent=0 // pred_fallthru
    _
  // Predicated region
  $region6: #{tpu_custom_call.1} parent=0 // pred_check
    _
  $region7: #{tpu_custom_call.1} parent=0 // pred_check_branch
    %11 = sbr.rel (0) target = $region9
  $region8: #{tpu_custom_call.1} parent=0 // pred_region
    _
  $region9: #{tpu_custom_call.1} parent=0 // pred_fallthru
    _
  // Predicated region
  $region10: #{tpu_custom_call.1} parent=0 // pred_check
    _
  $region11: #{tpu_custom_call.1} parent=0 // pred_check_branch
    %13 = sbr.rel (0) target = $region13
  $region12: #{tpu_custom_call.1} parent=0 // pred_region
    _
  $region13: #{tpu_custom_call.1} parent=0 // pred_fallthru
    _
  %v15 = vld [vmem:[%s0] sm:$0xff]
  %v16 = vld [vmem:[%s0 + $0x8] sm:$0xff]
  %v17 = vld [vmem:[%s0 + $0x10] sm:$0xff]
  %v18 = vld [vmem:[%s0 + $0x18] sm:$0xff]
  %v19 = vld [vmem:[%s0 + $0x20] sm:$0xff]
  %v20 = vld [vmem:[%s0 + $0x28] sm:$0xff]
  %v21 = vld [vmem:[%s0 + $0x30] sm:$0xff]
  %v22 = vld [vmem:[%s0 + $0x38] sm:$0xff]
  %v23 = vld [vmem:[%s0 + $0x40] sm:$0xff]
  %v24 = vld [vmem:[%s0 + $0x48] sm:$0xff]
  %v25 = vld [vmem:[%s0 + $0x50] sm:$0xff]
  %v26 = vld [vmem:[%s0 + $0x58] sm:$0xff]
  %v27 = vld [vmem:[%s0 + $0x60] sm:$0xff]
  %v28 = vld [vmem:[%s0 + $0x68] sm:$0xff]
  %v29 = vld [vmem:[%s0 + $0x70] sm:$0xff]
  %v30 = vld [vmem:[%s0 + $0x78] sm:$0xff]
  %v31 = vld [vmem:[%s0 + $0x80] sm:$0xff]
  %v32 = vld [vmem:[%s0 + $0x88] sm:$0xff]
  %v33 = vld [vmem:[%s0 + $0x90] sm:$0xff]
  %v34 = vld [vmem:[%s0 + $0x98] sm:$0xff]
  %v35 = vld [vmem:[%s0 + $0xa0] sm:$0xff]
  %v36 = vld [vmem:[%s0 + $0xa8] sm:$0xff]
  %v37 = vld [vmem:[%s0 + $0xb0] sm:$0xff]
  %v38 = vld [vmem:[%s0 + $0xb8] sm:$0xff]
  %v39 = vld [vmem:[%s0 + $0xc0] sm:$0xff]
  %v40 = vld [vmem:[%s0 + $0xc8] sm:$0xff]
  %v41 = vld [vmem:[%s0 + $0xd0] sm:$0xff]
  %v42 = vld [vmem:[%s0 + $0xd8] sm:$0xff]
  %v43 = vld [vmem:[%s0 + $0xe0] sm:$0xff]
  %v44 = vld [vmem:[%s0 + $0xe8] sm:$0xff]
  %v45 = vld [vmem:[%s0 + $0xf0] sm:$0xff]
  %v46 = vld [vmem:[%s0 + $0xf8] sm:$0xff]
  %v47 = vpack.c.bf16 %v16, %v15
  %v48 = vpack.c.bf16 %v18, %v17
  %v49 = vpack.c.bf16 %v20, %v19
  %v50 = vpack.c.bf16 %v22, %v21
  %v51 = vpack.c.bf16 %v24, %v23
  %v52 = vpack.c.bf16 %v26, %v25
  %v53 = vpack.c.bf16 %v28, %v27
  %v54 = vpack.c.bf16 %v30, %v29
  %v55 = vpack.c.bf16 %v32, %v31
  %v56 = vpack.c.bf16 %v34, %v33
  %v57 = vpack.c.bf16 %v36, %v35
  %v58 = vpack.c.bf16 %v38, %v37
  %v59 = vpack.c.bf16 %v40, %v39
  %v60 = vpack.c.bf16 %v42, %v41
  %v61 = vpack.c.bf16 %v44, %v43
  %v62 = vpack.c.bf16 %v46, %v45
  %v63 = vld [vmem:[%s1] sm:$0x3]
  %v64 = vld [vmem:[%s2] sm:$0x1]
  %v66 = vperm.slane %v64, 0
  %vm68 = vcmask 31744
  %v70 = vsel %vm68, %v47, 0
  %v73 = vsel %vm68, %v48, 0
  %v76 = vsel %vm68, %v49, 0
  %v79 = vsel %vm68, %v50, 0
  %v82 = vsel %vm68, %v51, 0
  %v85 = vsel %vm68, %v52, 0
  %v88 = vsel %vm68, %v53, 0
  %v91 = vsel %vm68, %v54, 0
  %v94 = vsel %vm68, %v55, 0
  %v97 = vsel %vm68, %v56, 0
  %v100 = vsel %vm68, %v57, 0
  %v103 = vsel %vm68, %v58, 0
  %v106 = vsel %vm68, %v59, 0
  %v109 = vsel %vm68, %v60, 0
  %v112 = vsel %vm68, %v61, 0
  %v115 = vsel %vm68, %v62, 0
  %vm117 = vcmask 1041408
  %v119 = vsel %vm117, %v63, 0
  %121 = vmatpush.bf16.msra.mxu0 0
  %122 = vmatpush.bf16.msra.mxu0 0
  %123 = vmatpush.bf16.msra.mxu0 0
  %124 = vmatpush.bf16.msra.mxu0 0
  %125 = vmatpush.bf16.msra.mxu0 0
  %126 = vmatpush.bf16.msra.mxu0 0
  %127 = vmatpush.bf16.msra.mxu0 0
  %128 = vmatpush.bf16.msra.mxu0 %v119
  %129 = vmatmul.bf16.gmra.mxu0 %v70
  %v130 = vpop.f32.mrf.mxu0
  %v131 = vadd.f32 %v66, %v130
  %v132 = vpop.f32.mrf.mxu0
  %v133 = vadd.f32 %v66, %v132
  %134 = vmatmul.bf16.gmra.mxu0 %v73
  %v135 = vpop.f32.mrf.mxu0
  %v136 = vadd.f32 %v66, %v135
  %v137 = vpop.f32.mrf.mxu0
  %v138 = vadd.f32 %v66, %v137
  %139 = vmatmul.bf16.gmra.mxu0 %v76
  %v140 = vpop.f32.mrf.mxu0
  %v141 = vadd.f32 %v66, %v140
  %v142 = vpop.f32.mrf.mxu0
  %v143 = vadd.f32 %v66, %v142
  %144 = vmatmul.bf16.gmra.mxu0 %v79
  %v145 = vpop.f32.mrf.mxu0
  %v146 = vadd.f32 %v66, %v145
  %v147 = vpop.f32.mrf.mxu0
  %v148 = vadd.f32 %v66, %v147
  %149 = vmatmul.bf16.gmra.mxu0 %v82
  %v150 = vpop.f32.mrf.mxu0
  %v151 = vadd.f32 %v66, %v150
  %v152 = vpop.f32.mrf.mxu0
  %v153 = vadd.f32 %v66, %v152
  %154 = vmatmul.bf16.gmra.mxu0 %v85
  %v155 = vpop.f32.mrf.mxu0
  %v156 = vadd.f32 %v66, %v155
  %v157 = vpop.f32.mrf.mxu0
  %v158 = vadd.f32 %v66, %v157
  %159 = vmatmul.bf16.gmra.mxu0 %v88
  %v160 = vpop.f32.mrf.mxu0
  %v161 = vadd.f32 %v66, %v160
  %v162 = vpop.f32.mrf.mxu0
  %v163 = vadd.f32 %v66, %v162
  %164 = vmatmul.bf16.gmra.mxu0 %v91
  %v165 = vpop.f32.mrf.mxu0
  %v166 = vadd.f32 %v66, %v165
  %v167 = vpop.f32.mrf.mxu0
  %v168 = vadd.f32 %v66, %v167
  %169 = vmatmul.bf16.gmra.mxu0 %v94
  %v170 = vpop.f32.mrf.mxu0
  %v171 = vadd.f32 %v66, %v170
  %v172 = vpop.f32.mrf.mxu0
  %v173 = vadd.f32 %v66, %v172
  %174 = vmatmul.bf16.gmra.mxu0 %v97
  %v175 = vpop.f32.mrf.mxu0
  %v176 = vadd.f32 %v66, %v175
  %v177 = vpop.f32.mrf.mxu0
  %v178 = vadd.f32 %v66, %v177
  %179 = vmatmul.bf16.gmra.mxu0 %v100
  %v180 = vpop.f32.mrf.mxu0
  %v181 = vadd.f32 %v66, %v180
  %v182 = vpop.f32.mrf.mxu0
  %v183 = vadd.f32 %v66, %v182
  %184 = vmatmul.bf16.gmra.mxu0 %v103
  %v185 = vpop.f32.mrf.mxu0
  %v186 = vadd.f32 %v66, %v185
  %v187 = vpop.f32.mrf.mxu0
  %v188 = vadd.f32 %v66, %v187
  %189 = vmatmul.bf16.gmra.mxu0 %v106
  %v190 = vpop.f32.mrf.mxu0
  %v191 = vadd.f32 %v66, %v190
  %v192 = vpop.f32.mrf.mxu0
  %v193 = vadd.f32 %v66, %v192
  %194 = vmatmul.bf16.gmra.mxu0 %v109
  %v195 = vpop.f32.mrf.mxu0
  %v196 = vadd.f32 %v66, %v195
  %v197 = vpop.f32.mrf.mxu0
  %v198 = vadd.f32 %v66, %v197
  %199 = vmatmul.bf16.gmra.mxu0 %v112
  %v200 = vpop.f32.mrf.mxu0
  %v201 = vadd.f32 %v66, %v200
  %v202 = vpop.f32.mrf.mxu0
  %v203 = vadd.f32 %v66, %v202
  %204 = vmatmul.bf16.gmra.mxu0 %v115
  %v205 = vpop.f32.mrf.mxu0
  %v206 = vadd.f32 %v66, %v205
  %v207 = vpop.f32.mrf.mxu0
  %v208 = vadd.f32 %v66, %v207
  %209 = vdwg.mxu0
  %vm210 = vcmask 261120
  %211 = vst.msk [vmem:[%s3] sm:$0xff] %vm210, %v131
  %212 = vst.msk [vmem:[%s3 + $0x8] sm:$0xff] %vm210, %v133
  %213 = vst.msk [vmem:[%s3 + $0x10] sm:$0xff] %vm210, %v136
  %214 = vst.msk [vmem:[%s3 + $0x18] sm:$0xff] %vm210, %v138
  %215 = vst.msk [vmem:[%s3 + $0x20] sm:$0xff] %vm210, %v141
  %216 = vst.msk [vmem:[%s3 + $0x28] sm:$0xff] %vm210, %v143
  %217 = vst.msk [vmem:[%s3 + $0x30] sm:$0xff] %vm210, %v146
  %218 = vst.msk [vmem:[%s3 + $0x38] sm:$0xff] %vm210, %v148
  %219 = vst.msk [vmem:[%s3 + $0x40] sm:$0xff] %vm210, %v151
  %220 = vst.msk [vmem:[%s3 + $0x48] sm:$0xff] %vm210, %v153
  %221 = vst.msk [vmem:[%s3 + $0x50] sm:$0xff] %vm210, %v156
  %222 = vst.msk [vmem:[%s3 + $0x58] sm:$0xff] %vm210, %v158
  %223 = vst.msk [vmem:[%s3 + $0x60] sm:$0xff] %vm210, %v161
  %224 = vst.msk [vmem:[%s3 + $0x68] sm:$0xff] %vm210, %v163
  %225 = vst.msk [vmem:[%s3 + $0x70] sm:$0xff] %vm210, %v166
  %226 = vst.msk [vmem:[%s3 + $0x78] sm:$0xff] %vm210, %v168
  %227 = vst.msk [vmem:[%s3 + $0x80] sm:$0xff] %vm210, %v171
  %228 = vst.msk [vmem:[%s3 + $0x88] sm:$0xff] %vm210, %v173
  %229 = vst.msk [vmem:[%s3 + $0x90] sm:$0xff] %vm210, %v176
  %230 = vst.msk [vmem:[%s3 + $0x98] sm:$0xff] %vm210, %v178
  %231 = vst.msk [vmem:[%s3 + $0xa0] sm:$0xff] %vm210, %v181
  %232 = vst.msk [vmem:[%s3 + $0xa8] sm:$0xff] %vm210, %v183
  %233 = vst.msk [vmem:[%s3 + $0xb0] sm:$0xff] %vm210, %v186
  %234 = vst.msk [vmem:[%s3 + $0xb8] sm:$0xff] %vm210, %v188
  %235 = vst.msk [vmem:[%s3 + $0xc0] sm:$0xff] %vm210, %v191
  %236 = vst.msk [vmem:[%s3 + $0xc8] sm:$0xff] %vm210, %v193
  %237 = vst.msk [vmem:[%s3 + $0xd0] sm:$0xff] %vm210, %v196
  %238 = vst.msk [vmem:[%s3 + $0xd8] sm:$0xff] %vm210, %v198
  %239 = vst.msk [vmem:[%s3 + $0xe0] sm:$0xff] %vm210, %v201
  %240 = vst.msk [vmem:[%s3 + $0xe8] sm:$0xff] %vm210, %v203
  %241 = vst.msk [vmem:[%s3 + $0xf0] sm:$0xff] %vm210, %v206
  %242 = vst.msk [vmem:[%s3 + $0xf8] sm:$0xff] %vm210, %v208
  // Predicated region
  $region14: #{tpu_custom_call.1} parent=0 // pred_check
    _
  $region15: #{tpu_custom_call.1} parent=0 // pred_check_branch
    %244 = sbr.rel (0) target = $region17
  $region16: #{tpu_custom_call.1} parent=0 // pred_region
    _
  $region17: #{tpu_custom_call.1} parent=0 // pred_fallthru
    _
  // Predicated region
  $region18: #{tpu_custom_call.1} parent=0 // pred_check
    _
  $region19: #{tpu_custom_call.1} parent=0 // pred_check_branch
    %246 = sbr.rel (0) target = $region21
  $region20: #{tpu_custom_call.1} parent=0 // pred_region
    _
  $region21: #{tpu_custom_call.1} parent=0 // pred_fallthru
    _

</llo_original>
